<compile_context>
chip_gen: v5e
topology: v5e:2x2
jax: 0.10.0
libtpu: 0.0.40
codegen_flags: <defaults>
</compile_context>

<pallas_src>
import functools

import jax
import jax.numpy as jnp
from jax import lax
from jax.experimental import pallas as pl
from jax.experimental.pallas import tpu as pltpu

LN_EPS = 1e-5  # nn.LayerNorm default


# ----------------------------------------------------------------------------
# Small helpers
# ----------------------------------------------------------------------------
def _cdiv(a, b):
    return -(-a // b)


def _round_up(x, m):
    return _cdiv(x, m) * m


def _vmem_limit(needed_bytes):
    # Raise the scoped VMEM limit to cover the chosen tiles (+ headroom),
    # but never above v7x's 64 MiB physical VMEM per TensorCore.
    return int(min(max(needed_bytes + (8 << 20), 32 << 20), 64 << 20))


def _choose_row_tile(n_rows, bytes_per_row, vmem_cap=48 << 20):
    """Pick a large row tile (<=512, multiple of 8) that fits the VMEM budget
    and keeps the grid at >=2 steps (megacore sharding on v7x) when possible."""
    tm = 512
    # Keep the double-buffered per-row traffic well inside the budget.
    while tm > 8 and 2 * tm * bytes_per_row > vmem_cap // 4:
        tm //= 2
    tm = max(8, tm)
    # Never bigger than the (8-padded) problem.
    tm = min(tm, _round_up(n_rows, 8))
    # Prefer >=2 grid steps so ("parallel",) can use both v7x TensorCores.
    while tm > 8 and _cdiv(n_rows, tm) < 2:
        tm = max(8, _round_up(tm // 2, 8))
    return tm


# ----------------------------------------------------------------------------
# Kernels
# ----------------------------------------------------------------------------
def _layernorm_kernel(x_ref, g_ref, b_ref, o_ref):
    # x_ref: (TM, D), g_ref/b_ref: (1, D), o_ref: (TM, D)
    x = x_ref[...].astype(jnp.float32)
    mean = jnp.mean(x, axis=-1, keepdims=True)
    xc = x - mean
    var = jnp.mean(xc * xc, axis=-1, keepdims=True)
    inv = lax.rsqrt(var + LN_EPS)                      # EUP rsqrt, fp32 stats
    o_ref[...] = (xc * inv * g_ref[...] + b_ref[...]).astype(o_ref.dtype)


def _prenorm_linear_kernel(x_ref, g_ref, b_ref, w_ref, wb_ref, o_ref,
                           *, use_bf16_matmul):
    # Fused LayerNorm + Linear: normalized rows never leave VMEM/vregs.
    # x_ref: (TM, D), g/b: (1, D), w_ref: (D, TN), wb_ref: (1, TN), o: (TM, TN)
    x = x_ref[...].astype(jnp.float32)
    mean = jnp.mean(x, axis=-1, keepdims=True)
    xc = x - mean
    var = jnp.mean(xc * xc, axis=-1, keepdims=True)
    inv = lax.rsqrt(var + LN_EPS)                      # fp32 statistics
    y = xc * inv * g_ref[...] + b_ref[...]
    if use_bf16_matmul:
        y = y.astype(jnp.bfloat16)                     # bf16 MXU inputs
    acc = jnp.dot(y, w_ref[...], preferred_element_type=jnp.float32)
    o_ref[...] = (acc + wb_ref[...].astype(jnp.float32)).astype(o_ref.dtype)


# ----------------------------------------------------------------------------
# Wrappers
# ----------------------------------------------------------------------------
def layer_norm_pallas(x, gamma, beta):
    """LayerNorm over the last dim (the PreNorm module's own compute)."""
    orig_shape = x.shape
    D = orig_shape[-1]
    x2 = x.reshape(-1, D)
    N = x2.shape[0]

    tm = _choose_row_tile(N, D * x2.dtype.itemsize)
    Np = _round_up(N, tm)
    if Np != N:
        x2 = jnp.pad(x2, ((0, Np - N), (0, 0)))

    vmem_bytes = _vmem_limit(
        2 * tm * D * x2.dtype.itemsize      # x tiles (double-buffered)
        + 2 * tm * D * x.dtype.itemsize     # out tiles (double-buffered)
        + 2 * tm * D * 4                    # fp32 working values
        + 8 * D * 4)                        # gamma / beta

    out = pl.pallas_call(
        _layernorm_kernel,
        out_shape=jax.ShapeDtypeStruct((Np, D), x.dtype),
        grid=(Np // tm,),
        in_specs=[
            pl.BlockSpec((tm, D), lambda i: (i, 0)),
            pl.BlockSpec((1, D), lambda i: (0, 0)),   # VMEM-resident params
            pl.BlockSpec((1, D), lambda i: (0, 0)),
        ],
        out_specs=pl.BlockSpec((tm, D), lambda i: (i, 0)),
        compiler_params=pltpu.CompilerParams(
            dimension_semantics=("parallel",),
            vmem_limit_bytes=vmem_bytes),
    )(x2, gamma.reshape(1, D), beta.reshape(1, D))

    return out[:N].reshape(orig_shape)


def pre_norm_forward(x, gamma, beta, fn, **kwargs):
    """Generic PreNorm.forward: fn(LayerNorm(x), **kwargs)."""
    return fn(layer_norm_pallas(x, gamma, beta), **kwargs)


def prenorm_linear_pallas(x, gamma, beta, w, wb, *, use_bf16_matmul=True):
    """Fused fast path for fn = Linear(D, DO): one pallas_call total."""
    orig_shape = x.shape
    D = orig_shape[-1]
    DO = w.shape[-1]
    x2 = x.reshape(-1, D)
    N = x2.shape[0]

    w_cast = w.astype(jnp.bfloat16) if use_bf16_matmul else w
    w_bytes = w_cast.dtype.itemsize

    # Tile the output-feature dim only when the full weight would blow the
    # VMEM budget (critical on v7x, 64 MiB/TC); otherwise keep it full-extent.
    if D * DO * w_bytes > (16 << 20):
        tn = 512                                # multiple of 128 -> dense vst
        DOp = _round_up(DO, tn)
    else:
        tn = DO
        DOp = DO
    if DOp != DO:
        w_cast = jnp.pad(w_cast, ((0, 0), (0, DOp - DO)))
        wb_p = jnp.pad(wb, ((0, DOp - DO),))
    else:
        wb_p = wb

    tm = _choose_row_tile(N, D * x2.dtype.itemsize + tn * x.dtype.itemsize)
    Np = _round_up(N, tm)
    if Np != N:
        x2 = jnp.pad(x2, ((0, Np - N), (0, 0)))

    vmem_bytes = _vmem_limit(
        2 * tm * D * x2.dtype.itemsize      # x tiles (double-buffered)
        + 2 * tm * tn * x.dtype.itemsize    # out tiles (double-buffered)
        + 2 * D * tn * w_bytes              # weight block
        + tm * (D + tn) * 4                 # fp32 working values
        + 8 * (D + tn) * 4)                 # gamma / beta / bias

    kernel = functools.partial(_prenorm_linear_kernel,
                               use_bf16_matmul=use_bf16_matmul)

    # Row axis outermost so the x tile stays resident while DO tiles vary.
    out = pl.pallas_call(
        kernel,
        out_shape=jax.ShapeDtypeStruct((Np, DOp), x.dtype),
        grid=(Np // tm, DOp // tn),
        in_specs=[
            pl.BlockSpec((tm, D), lambda i, j: (i, 0)),
            pl.BlockSpec((1, D), lambda i, j: (0, 0)),
            pl.BlockSpec((1, D), lambda i, j: (0, 0)),
            pl.BlockSpec((D, tn), lambda i, j: (0, j)),
            pl.BlockSpec((1, tn), lambda i, j: (0, j)),
        ],
        out_specs=pl.BlockSpec((tm, tn), lambda i, j: (i, j)),
        compiler_params=pltpu.CompilerParams(
            dimension_semantics=("parallel", "parallel"),
            vmem_limit_bytes=vmem_bytes),
    )(x2, gamma.reshape(1, D), beta.reshape(1, D), w_cast,
      wb_p.reshape(1, DOp))

    return out[:N, :DO].reshape(orig_shape[:-1] + (DO,))


# ----------------------------------------------------------------------------
# Deterministic example + correctness check
# ----------------------------------------------------------------------------
if __name__ == "__main__":
    key = jax.random.PRNGKey(0)
    kx, kg, kb, kw, kwb = jax.random.split(key, 5)

    # Small transformer-style PreNorm shapes: (batch, seq, dim)
    batch, seq, dim = 2, 8, 32
    d_out = 32  # example wrapped fn = Linear(dim, d_out)

    x = jax.random.normal(kx, (batch, seq, dim), jnp.float32)
    gamma = 1.0 + 0.1 * jax.random.normal(kg, (dim,), jnp.float32)
    beta = 0.1 * jax.random.normal(kb, (dim,), jnp.float32)
    w = jax.random.normal(kw, (dim, d_out), jnp.float32) / dim ** 0.5
    wb = 0.1 * jax.random.normal(kwb, (d_out,), jnp.float32)

    # Pure-JAX reference.
    mean = jnp.mean(x, axis=-1, keepdims=True)
    var = jnp.mean((x - mean) ** 2, axis=-1, keepdims=True)
    y_ref = (x - mean) / jnp.sqrt(var + LN_EPS) * gamma + beta
    out_ref = jnp.dot(y_ref, w) + wb

    # 1) Generic PreNorm path: Pallas LayerNorm, then arbitrary fn.
    fn = lambda y: jnp.dot(y, w) + wb
    out_generic = jax.block_until_ready(pre_norm_forward(x, gamma, beta, fn))

    # 2) Fused single-pallas_call path, fp32 matmul (bit-for-bit-ish check).
    out_fused_f32 = jax.block_until_ready(
        prenorm_linear_pallas(x, gamma, beta, w, wb, use_bf16_matmul=False))

    # 3) Fused single-pallas_call path, bf16 MXU inputs (production default).
    out_fused_bf16 = jax.block_until_ready(
        prenorm_linear_pallas(x, gamma, beta, w, wb, use_bf16_matmul=True))

    assert out_generic.shape == (batch, seq, d_out), out_generic.shape
    assert out_fused_f32.shape == (batch, seq, d_out), out_fused_f32.shape
    assert out_fused_bf16.shape == (batch, seq, d_out), out_fused_bf16.shape
    assert jnp.allclose(out_generic, out_ref, atol=1e-4, rtol=1e-4)
    assert jnp.allclose(out_fused_f32, out_ref, atol=1e-4, rtol=1e-4)
    assert jnp.allclose(out_fused_bf16, out_ref, atol=3e-2, rtol=3e-2)
    print("KERNEL_OK")
</pallas_src>

<mosaic_0001>
module attributes {stable_mosaic.version = 11 : i64} {
  func.func @_layernorm_kernel(%arg0: i32, %arg1: memref<8x32xf32, #tpu.memory_space<vmem>>, %arg2: memref<1x32xf32, #tpu.memory_space<vmem>>, %arg3: memref<1x32xf32, #tpu.memory_space<vmem>>, %arg4: memref<8x32xf32, #tpu.memory_space<vmem>>) attributes {dimension_semantics = [#tpu.dimension_semantics<parallel>], iteration_bounds = array<i64: 2>, scalar_prefetch = 0 : i64, scratch_operands = 0 : i64, tpu.core_type = #tpu.core_type<tc>, window_params = [{transform_indices = @transform_0, window_bounds = array<i64: 8, 32>}, {pipeline_mode = #tpu.pipeline_mode<synchronous>, transform_indices = @transform_1, window_bounds = array<i64: 1, 32>}, {pipeline_mode = #tpu.pipeline_mode<synchronous>, transform_indices = @transform_2, window_bounds = array<i64: 1, 32>}, {transform_indices = @transform_3, window_bounds = array<i64: 8, 32>}]} {
    %c0 = arith.constant 0 : index
    %c0_0 = arith.constant 0 : index
    %0 = vector.load %arg1[%c0, %c0_0] : memref<8x32xf32, #tpu.memory_space<vmem>>, vector<8x32xf32>
    %cst = arith.constant dense<0.000000e+00> : vector<8xf32>
    %1 = vector.multi_reduction <add>, %0, %cst [1] : vector<8x32xf32> to vector<8xf32>
    %2 = vector.shape_cast %1 : vector<8xf32> to vector<8x1xf32>
    %cst_1 = arith.constant 3.200000e+01 : f32
    %3 = vector.broadcast %cst_1 : f32 to vector<8x1xf32>
    %4 = arith.divf %2, %3 : vector<8x1xf32>
    %5 = vector.broadcast %4 : vector<8x1xf32> to vector<8x32xf32>
    %6 = arith.subf %0, %5 : vector<8x32xf32>
    %7 = arith.mulf %6, %6 : vector<8x32xf32>
    %cst_2 = arith.constant dense<0.000000e+00> : vector<8xf32>
    %8 = vector.multi_reduction <add>, %7, %cst_2 [1] : vector<8x32xf32> to vector<8xf32>
    %9 = vector.shape_cast %8 : vector<8xf32> to vector<8x1xf32>
    %cst_3 = arith.constant 3.200000e+01 : f32
    %10 = vector.broadcast %cst_3 : f32 to vector<8x1xf32>
    %11 = arith.divf %9, %10 : vector<8x1xf32>
    %cst_4 = arith.constant 9.99999974E-6 : f32
    %12 = vector.broadcast %cst_4 : f32 to vector<8x1xf32>
    %13 = arith.addf %11, %12 : vector<8x1xf32>
    %14 = math.rsqrt %13 : vector<8x1xf32>
    %15 = vector.broadcast %14 : vector<8x1xf32> to vector<8x32xf32>
    %16 = arith.mulf %6, %15 : vector<8x32xf32>
    %c0_5 = arith.constant 0 : index
    %c0_6 = arith.constant 0 : index
    %17 = vector.load %arg2[%c0_5, %c0_6] : memref<1x32xf32, #tpu.memory_space<vmem>>, vector<1x32xf32>
    %18 = vector.broadcast %17 : vector<1x32xf32> to vector<8x32xf32>
    %19 = arith.mulf %16, %18 : vector<8x32xf32>
    %c0_7 = arith.constant 0 : index
    %c0_8 = arith.constant 0 : index
    %20 = vector.load %arg3[%c0_7, %c0_8] : memref<1x32xf32, #tpu.memory_space<vmem>>, vector<1x32xf32>
    %21 = vector.broadcast %20 : vector<1x32xf32> to vector<8x32xf32>
    %22 = arith.addf %19, %21 : vector<8x32xf32>
    %c0_9 = arith.constant 0 : index
    %c0_10 = arith.constant 0 : index
    %23 = vector.load %arg4[%c0_9, %c0_10] : memref<8x32xf32, #tpu.memory_space<vmem>>, vector<8x32xf32>
    tpu.vector_store %arg4[%c0_9, %c0_10], %22 {strides = array<i32>} : memref<8x32xf32, #tpu.memory_space<vmem>>, vector<8x32xf32>,
    return
  }
  func.func @transform_0(%arg0: i32) -> (i32, i32) {
    %c0_i32 = arith.constant 0 : i32
    %c0_i32_0 = arith.constant 0 : i32
    return %arg0, %c0_i32 : i32, i32
  }
  func.func @transform_1(%arg0: i32) -> (i32, i32) {
    %c0_i32 = arith.constant 0 : i32
    %c0_i32_0 = arith.constant 0 : i32
    %c0_i32_1 = arith.constant 0 : i32
    return %c0_i32, %c0_i32_0 : i32, i32
  }
  func.func @transform_2(%arg0: i32) -> (i32, i32) {
    %c0_i32 = arith.constant 0 : i32
    %c0_i32_0 = arith.constant 0 : i32
    %c0_i32_1 = arith.constant 0 : i32
    return %c0_i32, %c0_i32_0 : i32, i32
  }
  func.func @transform_3(%arg0: i32) -> (i32, i32) {
    %c0_i32 = arith.constant 0 : i32
    %c0_i32_0 = arith.constant 0 : i32
    return %arg0, %c0_i32 : i32, i32
  }
}

</mosaic_0001>

<llo_original>
// kernel: tpu_custom_call.1
$region0: #{tpu_custom_call.1}
  #allocation0 [shape = 'u32[]', space=smem, size = 0x4, offset = 0x4, fixed_abs, tag = 'smem constant byte address 0x4 - core index']
  #allocation1 [shape = 'u32[72,128]{1,0:T(1,128)}', space=vmem, size = 0x9000, scoped, tag = 'internal scratch']
  %s0 = inlined_call_operand.hbm [shape: f32[16,32], index: 0, kind: input, shape index: {}]
  %s1 = inlined_call_operand.hbm [shape: f32[1,32], index: 1, kind: input, shape index: {}]
  %s2 = inlined_call_operand.vmem [shape: f32[1,32], index: 2, kind: input, shape index: {}]
  %s3 = inlined_call_operand.hbm [shape: f32[16,32], index: 3, kind: output, shape index: {}]
  %s4 = sld [smem:[#allocation0]]
  $region53: #{tpu_custom_call.1} parent=0
    _
  %s6 = ssub.s32 1, %s4
  %s7 = scalar_select 0, %s6, %s4
  $region1: #{tpu_custom_call.1} parent=0
    #allocation2 [shape = 'u8[8192]{0}', space=vmem, size = 0x2000, scoped, tag = 'input window, operand 0']
    #allocation3 [shape = 's32[2]{0}', space=sflag, size = 0x8, scoped, tag = 'scoped memory for tpu_custom_call.1']
    #allocation4 [shape = 's32[2]{0}', space=sflag, size = 0x8, scoped, tag = 'scoped memory for tpu_custom_call.1']
    #allocation5 [shape = 'u8[512]{0}', space=vmem, size = 0x400, scoped, tag = 'input window, operand 1, single buffered']
    #allocation6 [shape = 's32[1]{0}', space=sflag, size = 0x4, scoped, tag = 'scoped memory for tpu_custom_call.1']
    #allocation7 [shape = 'u8[8192]{0}', space=vmem, size = 0x2000, scoped, tag = 'output window, operand 0']
    %8 = vsyncpa [#allocation3], 0
    %s9 = scalar_lea.sflag [#allocation3], 1
    %10 = vsyncpa %s9, 0
    %11 = vsyncpa [#allocation6], 0
    %12 = vsyncpa [#allocation4], 0
    %s13 = scalar_lea.sflag [#allocation4], 1
    %14 = vsyncpa %s13, 0
    loop: start=0, step=1, limit=4
    $region2: #{tpu_custom_call.1} parent=1 // loop_pre_header
      _
    $region3: #{tpu_custom_call.1} parent=1 // loop_header
      %s16 = sphi 0, %s20
      %p17 = scmp.ge.s32.totalorder %s16, 4
      %s26 = sphi 0, %s28
      %s29 = sphi 0, %s26
      %s30 = sphi 0, %s29
      %s46 = sphi 0, %s30
      %s50 = sphi 0, %s50
      %s52 = sphi 0, %s50
      %s53 = sphi 0, %s52
      %s67 = sphi 0, %s53
      %s71 = sphi 0, %s71
      %s73 = sphi 0, %s71
      %s74 = sphi 0, %s73
      %s88 = sphi 0, %s74
      %s94 = sphi 0, %s96
      %s97 = sphi 0, %s94
      %s98 = sphi 0, %s97
      %s114 = sphi 0, %s98
    $region4: #{tpu_custom_call.1} parent=1 // loop_header_branch
      %19 = sbr.rel (%p17) target = $region8
    $region5: #{tpu_custom_call.1} parent=1 // loop_body
      %s21 = ssub.s32 %s16, 1
      %s22 = ssub.s32 %s16, 2
      %s23 = sadd.s32 %s16, 1
      %s24 = ssub.s32 %s16, %s23
      %p25 = scmp.eq.s32.totalorder %s24, 0
      %s27 = sadd.s32 %s26, 1
      %s28 = scalar_select %p25, %s26, %s27
      %p31 = pneg %p25
      %p32 = scmp.eq.s32.totalorder %s16, 1
      %p33 = por %p31, %p32
      %p34 = scmp.ne.s32.totalorder %s26, %s29
      %p35 = scmp.eq.s32.totalorder %s16, 0
      %p36 = por %p34, %p35
      %p37 = scmp.ne.s32.totalorder %s26, %s29
      %p38 = scmp.eq.s32.totalorder %s21, 1
      %p39 = por %p37, %p38
      %p40 = scmp.ne.s32.totalorder %s29, %s30
      %p41 = scmp.eq.s32.totalorder %s21, 0
      %p42 = por %p40, %p41
      %p43 = scmp.ne.s32.totalorder %s29, %s30
      %p44 = scmp.eq.s32.totalorder %s22, 1
      %p45 = por %p43, %p44
      %p47 = scmp.ne.s32.totalorder %s30, %s46
      %p48 = scmp.eq.s32.totalorder %s22, 0
      %p49 = por %p47, %p48
      %s51 = sadd.s32 %s50, 1
      %p54 = scmp.eq.s32.totalorder %s16, 1
      %p55 = scmp.ne.s32.totalorder %s50, %s52
      %p56 = scmp.eq.s32.totalorder %s16, 0
      %p57 = por %p55, %p56
      %p58 = scmp.ne.s32.totalorder %s50, %s52
      %p59 = scmp.eq.s32.totalorder %s21, 1
      %p60 = por %p58, %p59
      %p61 = scmp.ne.s32.totalorder %s52, %s53
      %p62 = scmp.eq.s32.totalorder %s21, 0
      %p63 = por %p61, %p62
      %p64 = scmp.ne.s32.totalorder %s52, %s53
      %p65 = scmp.eq.s32.totalorder %s22, 1
      %p66 = por %p64, %p65
      %p68 = scmp.ne.s32.totalorder %s53, %s67
      %p69 = scmp.eq.s32.totalorder %s22, 0
      %p70 = por %p68, %p69
      %s72 = sadd.s32 %s71, 1
      %p75 = scmp.eq.s32.totalorder %s16, 1
      %p76 = scmp.ne.s32.totalorder %s71, %s73
      %p77 = scmp.eq.s32.totalorder %s16, 0
      %p78 = por %p76, %p77
      %p79 = scmp.ne.s32.totalorder %s71, %s73
      %p80 = scmp.eq.s32.totalorder %s21, 1
      %p81 = por %p79, %p80
      %p82 = scmp.ne.s32.totalorder %s73, %s74
      %p83 = scmp.eq.s32.totalorder %s21, 0
      %p84 = por %p82, %p83
      %p85 = scmp.ne.s32.totalorder %s73, %s74
      %p86 = scmp.eq.s32.totalorder %s22, 1
      %p87 = por %p85, %p86
      %p89 = scmp.ne.s32.totalorder %s74, %s88
      %p90 = scmp.eq.s32.totalorder %s22, 0
      %p91 = por %p89, %p90
      %s92 = ssub.s32 %s16, %s23
      %p93 = scmp.eq.s32.totalorder %s92, 0
      %s95 = sadd.s32 %s94, 1
      %s96 = scalar_select %p93, %s94, %s95
      %p99 = pneg %p93
      %p100 = scmp.eq.s32.totalorder %s16, 1
      %p101 = por %p99, %p100
      %p102 = scmp.ne.s32.totalorder %s94, %s97
      %p103 = scmp.eq.s32.totalorder %s16, 0
      %p104 = por %p102, %p103
      %p105 = scmp.ne.s32.totalorder %s94, %s97
      %p106 = scmp.eq.s32.totalorder %s21, 1
      %p107 = por %p105, %p106
      %p108 = scmp.ne.s32.totalorder %s97, %s98
      %p109 = scmp.eq.s32.totalorder %s21, 0
      %p110 = por %p108, %p109
      %p111 = scmp.ne.s32.totalorder %s97, %s98
      %p112 = scmp.eq.s32.totalorder %s22, 1
      %p113 = por %p111, %p112
      %p115 = scmp.ne.s32.totalorder %s98, %s114
      %p116 = scmp.eq.s32.totalorder %s22, 0
      %p117 = por %p115, %p116
      %p118 = scmp.le.s32.totalorder 1, %s16
      %p119 = scmp.lt.s32.totalorder %s16, 3
      %p120 = pnand %p118, %p119
      %p121 = pneg %p120
      // Predicated region
      $region9: #{tpu_custom_call.1} parent=5 // pred_check
        _
      $region10: #{tpu_custom_call.1} parent=5 // pred_check_branch
        %123 = sbr.rel (%p120) target = $region12
      $region11: #{tpu_custom_call.1} parent=5 // pred_region
        %s124 = ssub.s32 %s16, 1
        // Predicated region
        $region13: #{tpu_custom_call.1} parent=11 // pred_check
          %p125 = pneg %p63
        $region14: #{tpu_custom_call.1} parent=11 // pred_check_branch
          %127 = sbr.rel (%p125) target = $region16
        $region15: #{tpu_custom_call.1} parent=11 // pred_region
          %129 = vsyncadd [#allocation6], 0
          %s131 = sshll.u32 %s1, 4
          %s132 = int_to_ptr.hbm [resolvable:$true] %s131
          %s133 = sshll.u32 [#allocation5], 4
          %s134 = int_to_ptr.vmem [resolvable:$true] %s133
          %136 = dma.hbm_to_vmem [thread:$0]  %s132, 16, %s134, [#allocation6]
        $region16: #{tpu_custom_call.1} parent=11 // pred_fallthru
          _
        // Predicated region
        $region17: #{tpu_custom_call.1} parent=11 // pred_check
          %p137 = pneg %p84
        $region18: #{tpu_custom_call.1} parent=11 // pred_check_branch
          %139 = sbr.rel (%p137) target = $region20
        $region19: #{tpu_custom_call.1} parent=11 // pred_region
          _
        $region20: #{tpu_custom_call.1} parent=11 // pred_fallthru
          _
      $region12: #{tpu_custom_call.1} parent=5 // pred_fallthru
        _
      %p140 = scmp.lt.s32.totalorder %s16, 2
      // Predicated region
      $region21: #{tpu_custom_call.1} parent=5 // pred_check
        %p141 = pneg %p140
      $region22: #{tpu_custom_call.1} parent=5 // pred_check_branch
        %143 = sbr.rel (%p141) target = $region24
      $region23: #{tpu_custom_call.1} parent=5 // pred_region
        // Predicated region
        $region25: #{tpu_custom_call.1} parent=23 // pred_check
          %p144 = pneg %p36
        $region26: #{tpu_custom_call.1} parent=23 // pred_check_branch
          %146 = sbr.rel (%p144) target = $region28
        $region27: #{tpu_custom_call.1} parent=23 // pred_region
          %s147 = sand.u32 %s26, 1
          %s148 = scalar_lea.sflag [#allocation3], %s147
          %s149 = sand.u32 %s26, 1
          %s150 = smul.addr %s149, 8
          %s151 = scalar_lea.vmem [#allocation2], %s150
          %153 = vsyncadd %s148, 0
          %s154 = smul.addr %s16, 8
          %s155 = scalar_lea.hbm %s0, %s154
          %s157 = sshll.u32 %s155, 4
          %s158 = int_to_ptr.hbm [resolvable:$true] %s157
          %s159 = sshll.u32 %s151, 4
          %s160 = int_to_ptr.vmem [resolvable:$true] %s159
          %162 = dma.hbm_to_vmem [thread:$0]  %s158, 128, %s160, %s148
        $region28: #{tpu_custom_call.1} parent=23 // pred_fallthru
          _
      $region24: #{tpu_custom_call.1} parent=5 // pred_fallthru
        _
      %p163 = scmp.le.s32.totalorder 1, %s16
      %p164 = scmp.lt.s32.totalorder %s16, 3
      %p165 = pnand %p163, %p164
      %p166 = pneg %p165
      // Predicated region
      $region29: #{tpu_custom_call.1} parent=5 // pred_check
        _
      $region30: #{tpu_custom_call.1} parent=5 // pred_check_branch
        %168 = sbr.rel (%p165) target = $region32
      $region31: #{tpu_custom_call.1} parent=5 // pred_region
        %s169 = ssub.s32 %s16, 1
        %s170 = sand.u32 %s29, 1
        %s171 = scalar_lea.sflag [#allocation3], %s170
        %s172 = sand.u32 %s29, 1
        %s173 = smul.addr %s172, 8
        %s174 = scalar_lea.vmem [#allocation2], %s173
        // Predicated region
        $region33: #{tpu_custom_call.1} parent=31 // pred_check
          %p175 = pneg %p42
        $region34: #{tpu_custom_call.1} parent=31 // pred_check_branch
          %177 = sbr.rel (%p175) target = $region36
        $region35: #{tpu_custom_call.1} parent=31 // pred_region
          %179 = dma.done %s171, 128
        $region36: #{tpu_custom_call.1} parent=31 // pred_fallthru
          _
        // Predicated region
        $region37: #{tpu_custom_call.1} parent=31 // pred_check
          %p180 = pneg %p63
        $region38: #{tpu_custom_call.1} parent=31 // pred_check_branch
          %182 = sbr.rel (%p180) target = $region40
        $region39: #{tpu_custom_call.1} parent=31 // pred_region
          %184 = dma.done [#allocation6], 16
        $region40: #{tpu_custom_call.1} parent=31 // pred_fallthru
          _
        %s185 = sand.u32 %s29, 1
        %s186 = scalar_lea.sflag [#allocation3], %s185
        %s187 = sand.u32 %s29, 1
        %s188 = smul.addr %s187, 8
        %s189 = scalar_lea.vmem [#allocation2], %s188
        %p190 = pneg %p42
        %p191 = pneg %p39
        %p192 = pneg %p63
        %p193 = pneg %p60
        %p194 = pneg %p84
        %p195 = pneg %p81
        %p196 = pneg %p110
        %p197 = pneg %p107
        %s198 = sand.u32 %s97, 1
        %s199 = scalar_lea.sflag [#allocation4], %s198
        %s200 = sand.u32 %s97, 1
        %s201 = smul.addr %s200, 8
        %s202 = scalar_lea.vmem [#allocation7], %s201
        %v203 = vld [vmem:[%s174] sm:$0xff]
        %vm204 = vcmask 261120
        %v205 = vsel %vm204, %v203, 0.0
        %206 = vadd.xlane.f32.xlu0 %v205
        %v207 = vpop.xlane.xlu0 %206
        %v208 = vrcp.pop 32.0
        %v209 = vmul.f32 32.0, %v208
        %v210 = vsub.f32 1.0, %v209
        %v211 = vmul.f32 %v208, %v210
        %v212 = vadd.f32 %v208, %v211
        %vm213 = vweird.f32 %v208
        %v214 = vsel %vm213, %v208, %v212
        %v215 = vmul.f32 %v207, %v214
        %v216 = vsub.f32 %v203, %v215
        %v217 = vmul.f32 %v216, %v216
        %v218 = vsel %vm204, %v217, 0.0
        %219 = vadd.xlane.f32.xlu0 %v218
        %v220 = vpop.xlane.xlu0 %219
        %v221 = vmul.f32 %v220, %v214
        %v222 = vadd.f32 %v221, 1e-05
        %v223 = vrsqrt.pop %v222
        %v224 = vmul.f32 %v223, %v222
        %v225 = vmul.f32 %v224, %v223
        %v226 = vmul.f32 0.5, %v225
        %v227 = vsub.f32 1.5, %v226
        %v228 = vmul.f32 %v223, %v227
        %vm229 = vweird.f32 %v222
        %vm230 = vweird.f32 %v223
        %vm231 = vmor %vm229, %vm230
        %v232 = vsel %vm231, %v223, %v228
        %v233 = vmul.f32 %v216, %v232
        %v234 = vld [vmem:[#allocation5] sm:$0x1]
        %v236 = vperm.slane %v234, 0
        %v238 = vmul.f32 %v233, %v236
        %v239 = vld [vmem:[%s2] sm:$0x1]
        %v241 = vperm.slane %v239, 0
        %v243 = vadd.f32 %v238, %v241
        %244 = vst.msk [vmem:[%s202] sm:$0xff] %vm204, %v243
        %s245 = sand.u32 %s97, 1
        %s246 = scalar_lea.sflag [#allocation4], %s245
        %s247 = sand.u32 %s97, 1
        %s248 = smul.addr %s247, 8
        %s249 = scalar_lea.vmem [#allocation7], %s248
        // Predicated region
        $region41: #{tpu_custom_call.1} parent=31 // pred_check
          %p250 = pneg %p107
        $region42: #{tpu_custom_call.1} parent=31 // pred_check_branch
          %252 = sbr.rel (%p250) target = $region44
        $region43: #{tpu_custom_call.1} parent=31 // pred_region
          %254 = vsyncadd %s246, 0
          %s255 = smul.addr %s21, 8
          %s256 = scalar_lea.hbm %s3, %s255
          %s258 = sshll.u32 %s249, 4
          %s259 = int_to_ptr.vmem [resolvable:$true] %s258
          %s260 = sshll.u32 %s256, 4
          %s261 = int_to_ptr.hbm [resolvable:$true] %s260
          %263 = dma.vmem_to_hbm [thread:$0]  %s259, 128, %s261, %s246
        $region44: #{tpu_custom_call.1} parent=31 // pred_fallthru
          _
      $region32: #{tpu_custom_call.1} parent=5 // pred_fallthru
        _
      %p264 = scmp.le.s32.totalorder 2, %s16
      // Predicated region
      $region45: #{tpu_custom_call.1} parent=5 // pred_check
        %p265 = pneg %p264
      $region46: #{tpu_custom_call.1} parent=5 // pred_check_branch
        %267 = sbr.rel (%p265) target = $region48
      $region47: #{tpu_custom_call.1} parent=5 // pred_region
        %s268 = ssub.s32 %s16, 2
        // Predicated region
        $region49: #{tpu_custom_call.1} parent=47 // pred_check
          %p269 = pneg %p113
        $region50: #{tpu_custom_call.1} parent=47 // pred_check_branch
          %271 = sbr.rel (%p269) target = $region52
        $region51: #{tpu_custom_call.1} parent=47 // pred_region
          %s272 = sand.u32 %s98, 1
          %s273 = scalar_lea.sflag [#allocation4], %s272
          %s274 = sand.u32 %s98, 1
          %s275 = smul.addr %s274, 8
          %s276 = scalar_lea.vmem [#allocation7], %s275
          %278 = dma.done %s273, 128
        $region52: #{tpu_custom_call.1} parent=47 // pred_fallthru
          _
      $region48: #{tpu_custom_call.1} parent=5 // pred_fallthru
        _
    $region6: #{tpu_custom_call.1} parent=1 // loop_footer
      %s20 = sadd.s32 1, %s16
    $region7: #{tpu_custom_call.1} parent=1 // loop_footer_branch
      %15 = sbr.rel target = $region3
    $region8: #{tpu_custom_call.1} parent=1 // loop_exit
      _
    %279 = vsyncpa [#allocation3], 1
    %s280 = scalar_lea.sflag [#allocation3], 1
    %281 = vsyncpa %s280, 1
    %282 = vsyncpa [#allocation6], 1
    %283 = vsyncpa [#allocation4], 1
    %s284 = scalar_lea.sflag [#allocation4], 1
    %285 = vsyncpa %s284, 1

</llo_original>
